<compile_context>
chip_gen: v7x
topology: tpu7x:2x2x1
jax: 0.10.0
libtpu: 0.0.40
codegen_flags: <defaults>
</compile_context>

<pallas_src>
import functools
import math

import jax
import jax.numpy as jnp
import numpy as np
from jax.experimental import pallas as pl
from jax.experimental.pallas import tpu as pltpu


def _adaptive_bins(in_size: int, out_size: int):
    """PyTorch AdaptiveAvg/MaxPool bin boundaries along one axis."""
    return [
        ((i * in_size) // out_size, math.ceil((i + 1) * in_size / out_size))
        for i in range(out_size)
    ]


def _pick_row_tile(rows: int, hw: int, itemsize: int) -> int:
    """Row tile for the flattened (N*C, HW) stream.

    Requirements:
      * multiple of 128: it is the lane dim of the transposed output block and
        (being >= 32) also satisfies every dtype's sublane minimum on the
        input block (f32: 8, bf16: 16, int8/fp8: 32);
      * divides `rows` exactly;
      * keeps a block at a few MiB so per-grid-step overhead is amortized
        while the double/triple-buffered footprint stays far below the
        scoped-VMEM limit on every TPU generation.
    If `rows` is small, use the whole row axis (full-dim blocks are legal).
    """
    budget = 4 << 20  # ~4 MiB per input block
    max_tr = budget // (hw * itemsize)
    if rows <= max(max_tr, 128):
        return rows
    tr = max(max_tr - (max_tr % 128), 128)
    while tr >= 128:
        if rows % tr == 0:
            return tr
        tr -= 128
    # TODO(synk): no 128-aligned divisor of rows; fall back to one full block.
    return rows


def _pgfa_avg_kernel(x_ref, w_ref, o_ref):
    # x block: (TR, HW) -- flattened (n, c) rows on sublanes, spatial on lanes.
    # Feed the native dtype straight to the MXU (f32 accumulation via
    # preferred_element_type); no VALU-burning whole-block cast.
    pools = jnp.dot(x_ref[...], w_ref[...],
                    preferred_element_type=jnp.float32)        # (TR, P+1)
    # Lane-dense store: (P+1, TR) with TR >= 128 on the lane axis (XLU
    # transpose, its slot is idle in this memory-bound kernel).
    o_ref[...] = jnp.transpose(pools).astype(o_ref.dtype)


def _pgfa_max_kernel(x_ref, o_ref, *, W, bins):
    x = x_ref[...]                                             # (TR, HW), native dtype
    # Per-part maxima over static lane slices (PyTorch adaptive-pool bins).
    parts = [jnp.max(x[:, s * W:e * W], axis=-1, keepdims=True)
             for (s, e) in bins]
    part_mat = jnp.concatenate(parts, axis=-1)                 # (TR, P)
    # Bins partition [0, H), so the global max is the max of the part maxima.
    gmax = jnp.max(part_mat, axis=-1, keepdims=True)           # (TR, 1)
    pooled = jnp.concatenate([gmax, part_mat], axis=-1)        # (TR, P+1)
    o_ref[...] = jnp.transpose(pooled).astype(o_ref.dtype)     # (P+1, TR)


def pgfa_pool(feat, num_parts=3, max_or_avg="avg"):
    """feat: NCHW. Returns (pool0, pool1) shaped (N, C, 1, 1) and
    (N, C, num_parts, 1), matching the nn.Module pooled outputs."""
    N, C, H, W = feat.shape
    HW = H * W
    P = num_parts
    rows = N * C
    x = feat.reshape(rows, HW)            # free reshape of contiguous NCHW
    bins = _adaptive_bins(H, P)
    itemsize = jnp.dtype(feat.dtype).itemsize

    TR = _pick_row_tile(rows, HW, itemsize)
    grid = (rows // TR,)                  # TR divides rows by construction

    # If an xprof trace shows exposed DMA gaps between steps, deepen the input
    # pipeline with: pl.BlockSpec((TR, HW), lambda r: (r, 0),
    #                             pipeline_mode=pl.Buffered(3))
    x_spec = pl.BlockSpec((TR, HW), lambda r: (r, 0))
    out_shape = jax.ShapeDtypeStruct((P + 1, rows), feat.dtype)
    out_spec = pl.BlockSpec((P + 1, TR), lambda r: (0, r))

    cparams = pltpu.CompilerParams(
        dimension_semantics=("parallel",),
        vmem_limit_bytes=32 << 20,
    )
    io_bytes = rows * HW * itemsize + (P + 1) * rows * itemsize

    if max_or_avg == "avg":
        # Static selection/averaging matrix: col 0 = global mean, col p+1 =
        # mean over part p's spatial rows (PyTorch adaptive-pool bins).
        wsel_np = np.zeros((HW, P + 1), np.float32)
        wsel_np[:, 0] = 1.0 / HW
        for p, (s, e) in enumerate(bins):
            wsel_np[s * W:e * W, p + 1] = 1.0 / ((e - s) * W)
        # Match the streamed dtype so the MXU consumes it natively (no f32
        # promotion of the big operand); accumulation stays f32.
        wsel_dtype = feat.dtype if jnp.issubdtype(feat.dtype, jnp.floating) \
            else jnp.float32
        wsel = jnp.asarray(wsel_np, dtype=wsel_dtype)

        cost = pl.CostEstimate(
            flops=2 * rows * HW * (P + 1),
            transcendentals=0,
            bytes_accessed=io_bytes + wsel.size * wsel.dtype.itemsize,
        )
        out = pl.pallas_call(
            _pgfa_avg_kernel,
            out_shape=out_shape,
            grid=grid,
            in_specs=[x_spec, pl.BlockSpec((HW, P + 1), lambda r: (0, 0))],
            out_specs=out_spec,
            compiler_params=cparams,
            cost_estimate=cost,
        )(x, wsel)
    else:
        # Max-path cost: ~one comparison per streamed element (advisory only).
        cost = pl.CostEstimate(
            flops=rows * (HW + P),
            transcendentals=0,
            bytes_accessed=io_bytes,
        )
        kernel = functools.partial(_pgfa_max_kernel, W=W, bins=bins)
        out = pl.pallas_call(
            kernel,
            out_shape=out_shape,
            grid=grid,
            in_specs=[x_spec],
            out_specs=out_spec,
            compiler_params=cparams,
            cost_estimate=cost,
        )(x)

    # Tiny host-side reshapes/transposes of the pooled result (negligible
    # next to the HBM stream) restore the module's output layout.
    pool0 = out[0].reshape(N, C, 1, 1)                              # (N, C, 1, 1)
    pool1 = jnp.transpose(out[1:].reshape(P, N, C), (1, 2, 0))[..., None]  # (N, C, P, 1)
    return pool0, pool1


def pgfa_pool_forward(in_dict, cfg):
    """Mirrors PGFAPool.forward (train/test flows)."""
    feat = in_dict["feat"]
    pool0, pool1 = pgfa_pool(feat, cfg["num_parts"], cfg["max_or_avg"])

    pool_feat_list = []
    for i, pf in enumerate((pool0, pool1)):
        if cfg["model_flow"] == "train":
            # Mirrors torch.squeeze(): drops *all* size-1 dims (incl. batch
            # when N == 1), matching the reference module.
            pf = jnp.squeeze(pf)
        elif cfg["model_flow"] == "test":
            if i == 0:
                pf = pf.reshape(-1, pf.shape[1])                   # (N, C)
            else:
                pf = jnp.transpose(jnp.squeeze(pf, -1), (0, 2, 1)) # (N, P, C)
        else:
            raise ValueError("Invalid phase {}".format(cfg["model_flow"]))
        pool_feat_list.append(pf)
    return {"pool_feat_list": pool_feat_list}


if __name__ == "__main__":
    # Small shapes consistent with the module: batch=2, channels=256, H=12, W=8.
    # (Real PGFA uses C=2048; the PyTorch test-flow 2048 assert is shape-only.)
    key = jax.random.PRNGKey(0)
    N, C, H, W = 2, 256, 12, 8
    num_parts = 3
    feat = jax.random.normal(key, (N, C, H, W), dtype=jnp.float32)
    bins = _adaptive_bins(H, num_parts)

    # --- avg pooling, train flow ---
    cfg = {"num_parts": num_parts, "max_or_avg": "avg", "model_flow": "train"}
    out = pgfa_pool_forward({"feat": feat}, cfg)
    p0, p1 = out["pool_feat_list"]
    jax.block_until_ready((p0, p1))

    ref0 = jnp.mean(feat, axis=(2, 3))                                      # (N, C)
    ref1 = jnp.stack(
        [jnp.mean(feat[:, :, s:e, :], axis=(2, 3)) for (s, e) in bins], axis=-1
    )                                                                       # (N, C, P)
    assert p0.shape == (N, C), p0.shape
    assert p1.shape == (N, C, num_parts), p1.shape
    assert jnp.allclose(p0, ref0, atol=1e-5, rtol=1e-5)
    assert jnp.allclose(p1, ref1, atol=1e-5, rtol=1e-5)

    # --- max pooling, test flow ---
    cfg_max = {"num_parts": num_parts, "max_or_avg": "max", "model_flow": "test"}
    out_m = pgfa_pool_forward({"feat": feat}, cfg_max)
    m0, m1 = out_m["pool_feat_list"]
    jax.block_until_ready((m0, m1))

    rmax0 = jnp.max(feat, axis=(2, 3))                                      # (N, C)
    rmax1 = jnp.stack(
        [jnp.max(feat[:, :, s:e, :], axis=(2, 3)) for (s, e) in bins], axis=1
    )                                                                       # (N, P, C)
    assert m0.shape == (N, C), m0.shape
    assert m1.shape == (N, num_parts, C), m1.shape
    assert jnp.allclose(m0, rmax0, atol=1e-5, rtol=1e-5)
    assert jnp.allclose(m1, rmax1, atol=1e-5, rtol=1e-5)

    print("KERNEL_OK")
</pallas_src>

<mosaic_0001>
module attributes {stable_mosaic.version = 11 : i64} {
  func.func @_pgfa_avg_kernel(%arg0: i32, %arg1: memref<512x96xf32, #tpu.memory_space<vmem>>, %arg2: memref<96x4xf32, #tpu.memory_space<vmem>>, %arg3: memref<4x512xf32, #tpu.memory_space<vmem>>) attributes {dimension_semantics = [#tpu.dimension_semantics<parallel>], iteration_bounds = array<i64: 1>, scalar_prefetch = 0 : i64, scratch_operands = 0 : i64, tpu.core_type = #tpu.core_type<tc>, window_params = [{transform_indices = @transform_0, window_bounds = array<i64: 512, 96>}, {pipeline_mode = #tpu.pipeline_mode<synchronous>, transform_indices = @transform_1, window_bounds = array<i64: 96, 4>}, {transform_indices = @transform_2, window_bounds = array<i64: 4, 512>}]} {
    %c0 = arith.constant 0 : index
    %c0_0 = arith.constant 0 : index
    %0 = vector.load %arg1[%c0, %c0_0] : memref<512x96xf32, #tpu.memory_space<vmem>>, vector<512x96xf32>
    %c0_1 = arith.constant 0 : index
    %c0_2 = arith.constant 0 : index
    %1 = vector.load %arg2[%c0_1, %c0_2] : memref<96x4xf32, #tpu.memory_space<vmem>>, vector<96x4xf32>
    %cst = arith.constant dense<0.000000e+00> : vector<512x4xf32>
    %2 = tpu.matmul %0, %1, %cst {dimension_numbers = #tpu.dot_dimension_numbers<[1], [0], [0], [1], [0, 0, 1, 1], [], []>} : vector<512x96xf32>, vector<96x4xf32>, vector<512x4xf32> -> vector<512x4xf32>
    %3 = tpu.transpose %2, [1, 0] : vector<512x4xf32> -> vector<4x512xf32>
    %c0_3 = arith.constant 0 : index
    %c0_4 = arith.constant 0 : index
    %4 = vector.load %arg3[%c0_3, %c0_4] : memref<4x512xf32, #tpu.memory_space<vmem>>, vector<4x512xf32>
    tpu.vector_store %arg3[%c0_3, %c0_4], %3 {strides = array<i32>} : memref<4x512xf32, #tpu.memory_space<vmem>>, vector<4x512xf32>,
    return
  }
  func.func @transform_0(%arg0: i32) -> (i32, i32) {
    %c0_i32 = arith.constant 0 : i32
    %c0_i32_0 = arith.constant 0 : i32
    return %arg0, %c0_i32 : i32, i32
  }
  func.func @transform_1(%arg0: i32) -> (i32, i32) {
    %c0_i32 = arith.constant 0 : i32
    %c0_i32_0 = arith.constant 0 : i32
    %c0_i32_1 = arith.constant 0 : i32
    return %c0_i32, %c0_i32_0 : i32, i32
  }
  func.func @transform_2(%arg0: i32) -> (i32, i32) {
    %c0_i32 = arith.constant 0 : i32
    %c0_i32_0 = arith.constant 0 : i32
    return %c0_i32, %arg0 : i32, i32
  }
}

</mosaic_0001>

<llo_original>
// kernel: tpu_custom_call.1
$region0: #{tpu_custom_call.1}
  #allocation0 [shape = 'u32[]', space=smem, size = 0x4, offset = 0x4, fixed_abs, tag = 'smem constant byte address 0x4 - core index']
  #allocation1 [shape = 'u32[144,128]{1,0:T(1,128)}', space=vmem, size = 0x12000, scoped, tag = 'internal scratch']
  %s0 = inlined_call_operand.vmem [shape: f32[512,96], index: 0, kind: input, shape index: {}]
  %s1 = inlined_call_operand.vmem [shape: f32[96,4], index: 1, kind: input, shape index: {}]
  %s2 = inlined_call_operand.hbm [shape: f32[4,512], index: 2, kind: output, shape index: {}]
  %s3 = sld [smem:[#allocation0]]
  $region18: #{tpu_custom_call.1} parent=0
    _
  %s5 = ssub.s32 1, %s3
  %s6 = scalar_select 0, %s5, %s3
  $region1: #{tpu_custom_call.1} parent=0
    #allocation2 [shape = 'u8[8192]{0}', space=vmem, size = 0x2000, scoped, tag = 'output window, operand 0, single buffered']
    #allocation3 [shape = 's32[1]{0}', space=sflag, size = 0x4, scoped, tag = 'scoped memory for tpu_custom_call.1']
    %7 = vsyncpa [#allocation3], 0
    // Predicated region
    $region2: #{tpu_custom_call.1} parent=1 // pred_check
      _
    $region3: #{tpu_custom_call.1} parent=1 // pred_check_branch
      %9 = sbr.rel (0) target = $region5
    $region4: #{tpu_custom_call.1} parent=1 // pred_region
      _
    $region5: #{tpu_custom_call.1} parent=1 // pred_fallthru
      _
    // Predicated region
    $region6: #{tpu_custom_call.1} parent=1 // pred_check
      _
    $region7: #{tpu_custom_call.1} parent=1 // pred_check_branch
      %11 = sbr.rel (0) target = $region9
    $region8: #{tpu_custom_call.1} parent=1 // pred_region
      _
    $region9: #{tpu_custom_call.1} parent=1 // pred_fallthru
      _
    %v12 = vld [vmem:[%s0] sm:$0xff]
    %v13 = vld [vmem:[%s0 + $0x8] sm:$0xff]
    %v14 = vld [vmem:[%s0 + $0x10] sm:$0xff]
    %v15 = vld [vmem:[%s0 + $0x18] sm:$0xff]
    %v16 = vld [vmem:[%s0 + $0x20] sm:$0xff]
    %v17 = vld [vmem:[%s0 + $0x28] sm:$0xff]
    %v18 = vld [vmem:[%s0 + $0x30] sm:$0xff]
    %v19 = vld [vmem:[%s0 + $0x38] sm:$0xff]
    %v20 = vld [vmem:[%s0 + $0x40] sm:$0xff]
    %v21 = vld [vmem:[%s0 + $0x48] sm:$0xff]
    %v22 = vld [vmem:[%s0 + $0x50] sm:$0xff]
    %v23 = vld [vmem:[%s0 + $0x58] sm:$0xff]
    %v24 = vld [vmem:[%s0 + $0x60] sm:$0xff]
    %v25 = vld [vmem:[%s0 + $0x68] sm:$0xff]
    %v26 = vld [vmem:[%s0 + $0x70] sm:$0xff]
    %v27 = vld [vmem:[%s0 + $0x78] sm:$0xff]
    %v28 = vld [vmem:[%s0 + $0x80] sm:$0xff]
    %v29 = vld [vmem:[%s0 + $0x88] sm:$0xff]
    %v30 = vld [vmem:[%s0 + $0x90] sm:$0xff]
    %v31 = vld [vmem:[%s0 + $0x98] sm:$0xff]
    %v32 = vld [vmem:[%s0 + $0xa0] sm:$0xff]
    %v33 = vld [vmem:[%s0 + $0xa8] sm:$0xff]
    %v34 = vld [vmem:[%s0 + $0xb0] sm:$0xff]
    %v35 = vld [vmem:[%s0 + $0xb8] sm:$0xff]
    %v36 = vld [vmem:[%s0 + $0xc0] sm:$0xff]
    %v37 = vld [vmem:[%s0 + $0xc8] sm:$0xff]
    %v38 = vld [vmem:[%s0 + $0xd0] sm:$0xff]
    %v39 = vld [vmem:[%s0 + $0xd8] sm:$0xff]
    %v40 = vld [vmem:[%s0 + $0xe0] sm:$0xff]
    %v41 = vld [vmem:[%s0 + $0xe8] sm:$0xff]
    %v42 = vld [vmem:[%s0 + $0xf0] sm:$0xff]
    %v43 = vld [vmem:[%s0 + $0xf8] sm:$0xff]
    %v44 = vld [vmem:[%s0 + $0x100] sm:$0xff]
    %v45 = vld [vmem:[%s0 + $0x108] sm:$0xff]
    %v46 = vld [vmem:[%s0 + $0x110] sm:$0xff]
    %v47 = vld [vmem:[%s0 + $0x118] sm:$0xff]
    %v48 = vld [vmem:[%s0 + $0x120] sm:$0xff]
    %v49 = vld [vmem:[%s0 + $0x128] sm:$0xff]
    %v50 = vld [vmem:[%s0 + $0x130] sm:$0xff]
    %v51 = vld [vmem:[%s0 + $0x138] sm:$0xff]
    %v52 = vld [vmem:[%s0 + $0x140] sm:$0xff]
    %v53 = vld [vmem:[%s0 + $0x148] sm:$0xff]
    %v54 = vld [vmem:[%s0 + $0x150] sm:$0xff]
    %v55 = vld [vmem:[%s0 + $0x158] sm:$0xff]
    %v56 = vld [vmem:[%s0 + $0x160] sm:$0xff]
    %v57 = vld [vmem:[%s0 + $0x168] sm:$0xff]
    %v58 = vld [vmem:[%s0 + $0x170] sm:$0xff]
    %v59 = vld [vmem:[%s0 + $0x178] sm:$0xff]
    %v60 = vld [vmem:[%s0 + $0x180] sm:$0xff]
    %v61 = vld [vmem:[%s0 + $0x188] sm:$0xff]
    %v62 = vld [vmem:[%s0 + $0x190] sm:$0xff]
    %v63 = vld [vmem:[%s0 + $0x198] sm:$0xff]
    %v64 = vld [vmem:[%s0 + $0x1a0] sm:$0xff]
    %v65 = vld [vmem:[%s0 + $0x1a8] sm:$0xff]
    %v66 = vld [vmem:[%s0 + $0x1b0] sm:$0xff]
    %v67 = vld [vmem:[%s0 + $0x1b8] sm:$0xff]
    %v68 = vld [vmem:[%s0 + $0x1c0] sm:$0xff]
    %v69 = vld [vmem:[%s0 + $0x1c8] sm:$0xff]
    %v70 = vld [vmem:[%s0 + $0x1d0] sm:$0xff]
    %v71 = vld [vmem:[%s0 + $0x1d8] sm:$0xff]
    %v72 = vld [vmem:[%s0 + $0x1e0] sm:$0xff]
    %v73 = vld [vmem:[%s0 + $0x1e8] sm:$0xff]
    %v74 = vld [vmem:[%s0 + $0x1f0] sm:$0xff]
    %v75 = vld [vmem:[%s0 + $0x1f8] sm:$0xff]
    %v76 = vld [vmem:[%s1] sm:$0xff]
    %v77 = vld [vmem:[%s1 + $0x8] sm:$0xff]
    %v78 = vld [vmem:[%s1 + $0x10] sm:$0xff]
    %v79 = vld [vmem:[%s1 + $0x18] sm:$0xff]
    %v80 = vld [vmem:[%s1 + $0x20] sm:$0xff]
    %v81 = vld [vmem:[%s1 + $0x28] sm:$0xff]
    %v82 = vld [vmem:[%s1 + $0x30] sm:$0xff]
    %v83 = vld [vmem:[%s1 + $0x38] sm:$0xff]
    %v84 = vld [vmem:[%s1 + $0x40] sm:$0xff]
    %v85 = vld [vmem:[%s1 + $0x48] sm:$0xff]
    %v86 = vld [vmem:[%s1 + $0x50] sm:$0xff]
    %v87 = vld [vmem:[%s1 + $0x58] sm:$0xff]
    %vm88 = vcmask 785408
    %v90 = vsel %vm88, %v12, 0
    %v93 = vsel %vm88, %v13, 0
    %v96 = vsel %vm88, %v14, 0
    %v99 = vsel %vm88, %v15, 0
    %v102 = vsel %vm88, %v16, 0
    %v105 = vsel %vm88, %v17, 0
    %v108 = vsel %vm88, %v18, 0
    %v111 = vsel %vm88, %v19, 0
    %v114 = vsel %vm88, %v20, 0
    %v117 = vsel %vm88, %v21, 0
    %v120 = vsel %vm88, %v22, 0
    %v123 = vsel %vm88, %v23, 0
    %v126 = vsel %vm88, %v24, 0
    %v129 = vsel %vm88, %v25, 0
    %v132 = vsel %vm88, %v26, 0
    %v135 = vsel %vm88, %v27, 0
    %v138 = vsel %vm88, %v28, 0
    %v141 = vsel %vm88, %v29, 0
    %v144 = vsel %vm88, %v30, 0
    %v147 = vsel %vm88, %v31, 0
    %v150 = vsel %vm88, %v32, 0
    %v153 = vsel %vm88, %v33, 0
    %v156 = vsel %vm88, %v34, 0
    %v159 = vsel %vm88, %v35, 0
    %v162 = vsel %vm88, %v36, 0
    %v165 = vsel %vm88, %v37, 0
    %v168 = vsel %vm88, %v38, 0
    %v171 = vsel %vm88, %v39, 0
    %v174 = vsel %vm88, %v40, 0
    %v177 = vsel %vm88, %v41, 0
    %v180 = vsel %vm88, %v42, 0
    %v183 = vsel %vm88, %v43, 0
    %v186 = vsel %vm88, %v44, 0
    %v189 = vsel %vm88, %v45, 0
    %v192 = vsel %vm88, %v46, 0
    %v195 = vsel %vm88, %v47, 0
    %v198 = vsel %vm88, %v48, 0
    %v201 = vsel %vm88, %v49, 0
    %v204 = vsel %vm88, %v50, 0
    %v207 = vsel %vm88, %v51, 0
    %v210 = vsel %vm88, %v52, 0
    %v213 = vsel %vm88, %v53, 0
    %v216 = vsel %vm88, %v54, 0
    %v219 = vsel %vm88, %v55, 0
    %v222 = vsel %vm88, %v56, 0
    %v225 = vsel %vm88, %v57, 0
    %v228 = vsel %vm88, %v58, 0
    %v231 = vsel %vm88, %v59, 0
    %v234 = vsel %vm88, %v60, 0
    %v237 = vsel %vm88, %v61, 0
    %v240 = vsel %vm88, %v62, 0
    %v243 = vsel %vm88, %v63, 0
    %v246 = vsel %vm88, %v64, 0
    %v249 = vsel %vm88, %v65, 0
    %v252 = vsel %vm88, %v66, 0
    %v255 = vsel %vm88, %v67, 0
    %v258 = vsel %vm88, %v68, 0
    %v261 = vsel %vm88, %v69, 0
    %v264 = vsel %vm88, %v70, 0
    %v267 = vsel %vm88, %v71, 0
    %v270 = vsel %vm88, %v72, 0
    %v273 = vsel %vm88, %v73, 0
    %v276 = vsel %vm88, %v74, 0
    %v279 = vsel %vm88, %v75, 0
    %281 = vmatprep.subr.mxu0 0.0
    %282 = vmatpush1.msra.mxu0 %v76
    %283 = vmatprep.subr.mxu0 0.0
    %284 = vmatpush1.msra.mxu0 %v77
    %285 = vmatprep.subr.mxu0 0.0
    %286 = vmatpush1.msra.mxu0 %v78
    %287 = vmatprep.subr.mxu0 0.0
    %288 = vmatpush1.msra.mxu0 %v79
    %289 = vmatprep.subr.mxu0 0.0
    %290 = vmatpush1.msra.mxu0 %v80
    %291 = vmatprep.subr.mxu0 0.0
    %292 = vmatpush1.msra.mxu0 %v81
    %293 = vmatprep.subr.mxu0 0.0
    %294 = vmatpush1.msra.mxu0 %v82
    %295 = vmatprep.subr.mxu0 0.0
    %296 = vmatpush1.msra.mxu0 %v83
    %297 = vmatprep.subr.mxu0 0.0
    %298 = vmatpush1.msra.mxu0 %v84
    %299 = vmatprep.subr.mxu0 0.0
    %300 = vmatpush1.msra.mxu0 %v85
    %301 = vmatprep.subr.mxu0 0.0
    %302 = vmatpush1.msra.mxu0 %v86
    %303 = vmatprep.subr.mxu0 0.0
    %304 = vmatpush1.msra.mxu0 %v87
    %305 = vmatprep.subr.mxu0 0.0
    %306 = vmatpush1.msra.mxu0 0.0
    %307 = vmatprep.subr.mxu0 0.0
    %308 = vmatpush1.msra.mxu0 0.0
    %309 = vmatprep.subr.mxu0 0.0
    %310 = vmatpush1.msra.mxu0 0.0
    %311 = vmatprep.subr.mxu0 0.0
    %312 = vmatpush1.msra.mxu0 0.0
    %313 = vmatprep.subr.mxu0 0.0
    %314 = vmatpush1.msra.mxu0 0.0
    %315 = vmatprep.subr.mxu0 0.0
    %316 = vmatpush1.msra.mxu0 0.0
    %317 = vmatprep.subr.mxu0 0.0
    %318 = vmatpush1.msra.mxu0 0.0
    %319 = vmatprep.subr.mxu0 0.0
    %320 = vmatpush1.msra.mxu0 0.0
    %321 = vmatprep.subr.mxu0 0.0
    %322 = vmatpush1.msra.mxu0 0.0
    %323 = vmatprep.subr.mxu0 0.0
    %324 = vmatpush1.msra.mxu0 0.0
    %325 = vmatprep.subr.mxu0 0.0
    %326 = vmatpush1.msra.mxu0 0.0
    %327 = vmatprep.subr.mxu0 0.0
    %328 = vmatpush1.msra.mxu0 0.0
    %329 = vmatprep.subr.mxu0 0.0
    %330 = vmatpush1.msra.mxu0 0.0
    %331 = vmatprep.subr.mxu0 0.0
    %332 = vmatpush1.msra.mxu0 0.0
    %333 = vmatprep.subr.mxu0 0.0
    %334 = vmatpush1.msra.mxu0 0.0
    %335 = vmatprep.subr.mxu0 0.0
    %336 = vmatpush1.msra.mxu0 0.0
    %337 = vmatprep.subr.mxu0 0.0
    %338 = vmatpush1.msra.mxu0 0.0
    %339 = vmatprep.subr.mxu0 0.0
    %340 = vmatpush1.msra.mxu0 0.0
    %341 = vmatprep.subr.mxu0 0.0
    %342 = vmatpush1.msra.mxu0 0.0
    %343 = vmatprep.subr.mxu0 0.0
    %344 = vmatpush1.msra.mxu0 0.0
    %345 = vmatprep.mubr.f32.mxu0 0.0
    %346 = vmatmul.mubr.f32.gmra.mrb[0].mxu0 %v90
    %v347 = vpop.f32.mrb[0].mxu0
    %v348 = vadd.f32 0.0, %v347
    %v349 = vpop.f32.mrb[0].mxu0
    %350 = vmatprep.mubr.f32.mxu0 0.0
    %351 = vmatmul.mubr.f32.gmra.mrb[0].mxu0 %v93
    %v352 = vpop.f32.mrb[0].mxu0
    %v353 = vadd.f32 0.0, %v352
    %v354 = vpop.f32.mrb[0].mxu0
    %355 = vmatprep.mubr.f32.mxu0 0.0
    %356 = vmatmul.mubr.f32.gmra.mrb[0].mxu0 %v96
    %v357 = vpop.f32.mrb[0].mxu0
    %v358 = vadd.f32 0.0, %v357
    %v359 = vpop.f32.mrb[0].mxu0
    %360 = vmatprep.mubr.f32.mxu0 0.0
    %361 = vmatmul.mubr.f32.gmra.mrb[0].mxu0 %v99
    %v362 = vpop.f32.mrb[0].mxu0
    %v363 = vadd.f32 0.0, %v362
    %v364 = vpop.f32.mrb[0].mxu0
    %365 = vmatprep.mubr.f32.mxu0 0.0
    %366 = vmatmul.mubr.f32.gmra.mrb[0].mxu0 %v102
    %v367 = vpop.f32.mrb[0].mxu0
    %v368 = vadd.f32 0.0, %v367
    %v369 = vpop.f32.mrb[0].mxu0
    %370 = vmatprep.mubr.f32.mxu0 0.0
    %371 = vmatmul.mubr.f32.gmra.mrb[0].mxu0 %v105
    %v372 = vpop.f32.mrb[0].mxu0
    %v373 = vadd.f32 0.0, %v372
    %v374 = vpop.f32.mrb[0].mxu0
    %375 = vmatprep.mubr.f32.mxu0 0.0
    %376 = vmatmul.mubr.f32.gmra.mrb[0].mxu0 %v108
    %v377 = vpop.f32.mrb[0].mxu0
    %v378 = vadd.f32 0.0, %v377
    %v379 = vpop.f32.mrb[0].mxu0
    %380 = vmatprep.mubr.f32.mxu0 0.0
    %381 = vmatmul.mubr.f32.gmra.mrb[0].mxu0 %v111
    %v382 = vpop.f32.mrb[0].mxu0
    %v383 = vadd.f32 0.0, %v382
    %v384 = vpop.f32.mrb[0].mxu0
    %385 = vmatprep.mubr.f32.mxu0 0.0
    %386 = vmatmul.mubr.f32.gmra.mrb[0].mxu0 %v114
    %v387 = vpop.f32.mrb[0].mxu0
    %v388 = vadd.f32 0.0, %v387
    %v389 = vpop.f32.mrb[0].mxu0
    %390 = vmatprep.mubr.f32.mxu0 0.0
    %391 = vmatmul.mubr.f32.gmra.mrb[0].mxu0 %v117
    %v392 = vpop.f32.mrb[0].mxu0
    %v393 = vadd.f32 0.0, %v392
    %v394 = vpop.f32.mrb[0].mxu0
    %395 = vmatprep.mubr.f32.mxu0 0.0
    %396 = vmatmul.mubr.f32.gmra.mrb[0].mxu0 %v120
    %v397 = vpop.f32.mrb[0].mxu0
    %v398 = vadd.f32 0.0, %v397
    %v399 = vpop.f32.mrb[0].mxu0
    %400 = vmatprep.mubr.f32.mxu0 0.0
    %401 = vmatmul.mubr.f32.gmra.mrb[0].mxu0 %v123
    %v402 = vpop.f32.mrb[0].mxu0
    %v403 = vadd.f32 0.0, %v402
    %v404 = vpop.f32.mrb[0].mxu0
    %405 = vmatprep.mubr.f32.mxu0 0.0
    %406 = vmatmul.mubr.f32.gmra.mrb[0].mxu0 %v126
    %v407 = vpop.f32.mrb[0].mxu0
    %v408 = vadd.f32 0.0, %v407
    %v409 = vpop.f32.mrb[0].mxu0
    %410 = vmatprep.mubr.f32.mxu0 0.0
    %411 = vmatmul.mubr.f32.gmra.mrb[0].mxu0 %v129
    %v412 = vpop.f32.mrb[0].mxu0
    %v413 = vadd.f32 0.0, %v412
    %v414 = vpop.f32.mrb[0].mxu0
    %415 = vmatprep.mubr.f32.mxu0 0.0
    %416 = vmatmul.mubr.f32.gmra.mrb[0].mxu0 %v132
    %v417 = vpop.f32.mrb[0].mxu0
    %v418 = vadd.f32 0.0, %v417
    %v419 = vpop.f32.mrb[0].mxu0
    %420 = vmatprep.mubr.f32.mxu0 0.0
    %421 = vmatmul.mubr.f32.gmra.mrb[0].mxu0 %v135
    %v422 = vpop.f32.mrb[0].mxu0
    %v423 = vadd.f32 0.0, %v422
    %v424 = vpop.f32.mrb[0].mxu0
    %425 = vmatprep.mubr.f32.mxu0 0.0
    %426 = vmatmul.mubr.f32.gmra.mrb[0].mxu0 %v138
    %v427 = vpop.f32.mrb[0].mxu0
    %v428 = vadd.f32 0.0, %v427
    %v429 = vpop.f32.mrb[0].mxu0
    %430 = vmatprep.mubr.f32.mxu0 0.0
    %431 = vmatmul.mubr.f32.gmra.mrb[0].mxu0 %v141
    %v432 = vpop.f32.mrb[0].mxu0
    %v433 = vadd.f32 0.0, %v432
    %v434 = vpop.f32.mrb[0].mxu0
    %435 = vmatprep.mubr.f32.mxu0 0.0
    %436 = vmatmul.mubr.f32.gmra.mrb[0].mxu0 %v144
    %v437 = vpop.f32.mrb[0].mxu0
    %v438 = vadd.f32 0.0, %v437
    %v439 = vpop.f32.mrb[0].mxu0
    %440 = vmatprep.mubr.f32.mxu0 0.0
    %441 = vmatmul.mubr.f32.gmra.mrb[0].mxu0 %v147
    %v442 = vpop.f32.mrb[0].mxu0
    %v443 = vadd.f32 0.0, %v442
    %v444 = vpop.f32.mrb[0].mxu0
    %445 = vmatprep.mubr.f32.mxu0 0.0
    %446 = vmatmul.mubr.f32.gmra.mrb[0].mxu0 %v150
    %v447 = vpop.f32.mrb[0].mxu0
    %v448 = vadd.f32 0.0, %v447
    %v449 = vpop.f32.mrb[0].mxu0
    %450 = vmatprep.mubr.f32.mxu0 0.0
    %451 = vmatmul.mubr.f32.gmra.mrb[0].mxu0 %v153
    %v452 = vpop.f32.mrb[0].mxu0
    %v453 = vadd.f32 0.0, %v452
    %v454 = vpop.f32.mrb[0].mxu0
    %455 = vmatprep.mubr.f32.mxu0 0.0
    %456 = vmatmul.mubr.f32.gmra.mrb[0].mxu0 %v156
    %v457 = vpop.f32.mrb[0].mxu0
    %v458 = vadd.f32 0.0, %v457
    %v459 = vpop.f32.mrb[0].mxu0
    %460 = vmatprep.mubr.f32.mxu0 0.0
    %461 = vmatmul.mubr.f32.gmra.mrb[0].mxu0 %v159
    %v462 = vpop.f32.mrb[0].mxu0
    %v463 = vadd.f32 0.0, %v462
    %v464 = vpop.f32.mrb[0].mxu0
    %465 = vmatprep.mubr.f32.mxu0 0.0
    %466 = vmatmul.mubr.f32.gmra.mrb[0].mxu0 %v162
    %v467 = vpop.f32.mrb[0].mxu0
    %v468 = vadd.f32 0.0, %v467
    %v469 = vpop.f32.mrb[0].mxu0
    %470 = vmatprep.mubr.f32.mxu0 0.0
    %471 = vmatmul.mubr.f32.gmra.mrb[0].mxu0 %v165
    %v472 = vpop.f32.mrb[0].mxu0
    %v473 = vadd.f32 0.0, %v472
    %v474 = vpop.f32.mrb[0].mxu0
    %475 = vmatprep.mubr.f32.mxu0 0.0
    %476 = vmatmul.mubr.f32.gmra.mrb[0].mxu0 %v168
    %v477 = vpop.f32.mrb[0].mxu0
    %v478 = vadd.f32 0.0, %v477
    %v479 = vpop.f32.mrb[0].mxu0
    %480 = vmatprep.mubr.f32.mxu0 0.0
    %481 = vmatmul.mubr.f32.gmra.mrb[0].mxu0 %v171
    %v482 = vpop.f32.mrb[0].mxu0
    %v483 = vadd.f32 0.0, %v482
    %v484 = vpop.f32.mrb[0].mxu0
    %485 = vmatprep.mubr.f32.mxu0 0.0
    %486 = vmatmul.mubr.f32.gmra.mrb[0].mxu0 %v174
    %v487 = vpop.f32.mrb[0].mxu0
    %v488 = vadd.f32 0.0, %v487
    %v489 = vpop.f32.mrb[0].mxu0
    %490 = vmatprep.mubr.f32.mxu0 0.0
    %491 = vmatmul.mubr.f32.gmra.mrb[0].mxu0 %v177
    %v492 = vpop.f32.mrb[0].mxu0
    %v493 = vadd.f32 0.0, %v492
    %v494 = vpop.f32.mrb[0].mxu0
    %495 = vmatprep.mubr.f32.mxu0 0.0
    %496 = vmatmul.mubr.f32.gmra.mrb[0].mxu0 %v180
    %v497 = vpop.f32.mrb[0].mxu0
    %v498 = vadd.f32 0.0, %v497
    %v499 = vpop.f32.mrb[0].mxu0
    %500 = vmatprep.mubr.f32.mxu0 0.0
    %501 = vmatmul.mubr.f32.gmra.mrb[0].mxu0 %v183
    %v502 = vpop.f32.mrb[0].mxu0
    %v503 = vadd.f32 0.0, %v502
    %v504 = vpop.f32.mrb[0].mxu0
    %505 = vmatprep.mubr.f32.mxu0 0.0
    %506 = vmatmul.mubr.f32.gmra.mrb[0].mxu0 %v186
    %v507 = vpop.f32.mrb[0].mxu0
    %v508 = vadd.f32 0.0, %v507
    %v509 = vpop.f32.mrb[0].mxu0
    %510 = vmatprep.mubr.f32.mxu0 0.0
    %511 = vmatmul.mubr.f32.gmra.mrb[0].mxu0 %v189
    %v512 = vpop.f32.mrb[0].mxu0
    %v513 = vadd.f32 0.0, %v512
    %v514 = vpop.f32.mrb[0].mxu0
    %515 = vmatprep.mubr.f32.mxu0 0.0
    %516 = vmatmul.mubr.f32.gmra.mrb[0].mxu0 %v192
    %v517 = vpop.f32.mrb[0].mxu0
    %v518 = vadd.f32 0.0, %v517
    %v519 = vpop.f32.mrb[0].mxu0
    %520 = vmatprep.mubr.f32.mxu0 0.0
    %521 = vmatmul.mubr.f32.gmra.mrb[0].mxu0 %v195
    %v522 = vpop.f32.mrb[0].mxu0
    %v523 = vadd.f32 0.0, %v522
    %v524 = vpop.f32.mrb[0].mxu0
    %525 = vmatprep.mubr.f32.mxu0 0.0
    %526 = vmatmul.mubr.f32.gmra.mrb[0].mxu0 %v198
    %v527 = vpop.f32.mrb[0].mxu0
    %v528 = vadd.f32 0.0, %v527
    %v529 = vpop.f32.mrb[0].mxu0
    %530 = vmatprep.mubr.f32.mxu0 0.0
    %531 = vmatmul.mubr.f32.gmra.mrb[0].mxu0 %v201
    %v532 = vpop.f32.mrb[0].mxu0
    %v533 = vadd.f32 0.0, %v532
    %v534 = vpop.f32.mrb[0].mxu0
    %535 = vmatprep.mubr.f32.mxu0 0.0
    %536 = vmatmul.mubr.f32.gmra.mrb[0].mxu0 %v204
    %v537 = vpop.f32.mrb[0].mxu0
    %v538 = vadd.f32 0.0, %v537
    %v539 = vpop.f32.mrb[0].mxu0
    %540 = vmatprep.mubr.f32.mxu0 0.0
    %541 = vmatmul.mubr.f32.gmra.mrb[0].mxu0 %v207
    %v542 = vpop.f32.mrb[0].mxu0
    %v543 = vadd.f32 0.0, %v542
    %v544 = vpop.f32.mrb[0].mxu0
    %545 = vmatprep.mubr.f32.mxu0 0.0
    %546 = vmatmul.mubr.f32.gmra.mrb[0].mxu0 %v210
    %v547 = vpop.f32.mrb[0].mxu0
    %v548 = vadd.f32 0.0, %v547
    %v549 = vpop.f32.mrb[0].mxu0
    %550 = vmatprep.mubr.f32.mxu0 0.0
    %551 = vmatmul.mubr.f32.gmra.mrb[0].mxu0 %v213
    %v552 = vpop.f32.mrb[0].mxu0
    %v553 = vadd.f32 0.0, %v552
    %v554 = vpop.f32.mrb[0].mxu0
    %555 = vmatprep.mubr.f32.mxu0 0.0
    %556 = vmatmul.mubr.f32.gmra.mrb[0].mxu0 %v216
    %v557 = vpop.f32.mrb[0].mxu0
    %v558 = vadd.f32 0.0, %v557
    %v559 = vpop.f32.mrb[0].mxu0
    %560 = vmatprep.mubr.f32.mxu0 0.0
    %561 = vmatmul.mubr.f32.gmra.mrb[0].mxu0 %v219
    %v562 = vpop.f32.mrb[0].mxu0
    %v563 = vadd.f32 0.0, %v562
    %v564 = vpop.f32.mrb[0].mxu0
    %565 = vmatprep.mubr.f32.mxu0 0.0
    %566 = vmatmul.mubr.f32.gmra.mrb[0].mxu0 %v222
    %v567 = vpop.f32.mrb[0].mxu0
    %v568 = vadd.f32 0.0, %v567
    %v569 = vpop.f32.mrb[0].mxu0
    %570 = vmatprep.mubr.f32.mxu0 0.0
    %571 = vmatmul.mubr.f32.gmra.mrb[0].mxu0 %v225
    %v572 = vpop.f32.mrb[0].mxu0
    %v573 = vadd.f32 0.0, %v572
    %v574 = vpop.f32.mrb[0].mxu0
    %575 = vmatprep.mubr.f32.mxu0 0.0
    %576 = vmatmul.mubr.f32.gmra.mrb[0].mxu0 %v228
    %v577 = vpop.f32.mrb[0].mxu0
    %v578 = vadd.f32 0.0, %v577
    %v579 = vpop.f32.mrb[0].mxu0
    %580 = vmatprep.mubr.f32.mxu0 0.0
    %581 = vmatmul.mubr.f32.gmra.mrb[0].mxu0 %v231
    %v582 = vpop.f32.mrb[0].mxu0
    %v583 = vadd.f32 0.0, %v582
    %v584 = vpop.f32.mrb[0].mxu0
    %585 = vmatprep.mubr.f32.mxu0 0.0
    %586 = vmatmul.mubr.f32.gmra.mrb[0].mxu0 %v234
    %v587 = vpop.f32.mrb[0].mxu0
    %v588 = vadd.f32 0.0, %v587
    %v589 = vpop.f32.mrb[0].mxu0
    %590 = vmatprep.mubr.f32.mxu0 0.0
    %591 = vmatmul.mubr.f32.gmra.mrb[0].mxu0 %v237
    %v592 = vpop.f32.mrb[0].mxu0
    %v593 = vadd.f32 0.0, %v592
    %v594 = vpop.f32.mrb[0].mxu0
    %595 = vmatprep.mubr.f32.mxu0 0.0
    %596 = vmatmul.mubr.f32.gmra.mrb[0].mxu0 %v240
    %v597 = vpop.f32.mrb[0].mxu0
    %v598 = vadd.f32 0.0, %v597
    %v599 = vpop.f32.mrb[0].mxu0
    %600 = vmatprep.mubr.f32.mxu0 0.0
    %601 = vmatmul.mubr.f32.gmra.mrb[0].mxu0 %v243
    %v602 = vpop.f32.mrb[0].mxu0
    %v603 = vadd.f32 0.0, %v602
    %v604 = vpop.f32.mrb[0].mxu0
    %605 = vmatprep.mubr.f32.mxu0 0.0
    %606 = vmatmul.mubr.f32.gmra.mrb[0].mxu0 %v246
    %v607 = vpop.f32.mrb[0].mxu0
    %v608 = vadd.f32 0.0, %v607
    %v609 = vpop.f32.mrb[0].mxu0
    %610 = vmatprep.mubr.f32.mxu0 0.0
    %611 = vmatmul.mubr.f32.gmra.mrb[0].mxu0 %v249
    %v612 = vpop.f32.mrb[0].mxu0
    %v613 = vadd.f32 0.0, %v612
    %v614 = vpop.f32.mrb[0].mxu0
    %615 = vmatprep.mubr.f32.mxu0 0.0
    %616 = vmatmul.mubr.f32.gmra.mrb[0].mxu0 %v252
    %v617 = vpop.f32.mrb[0].mxu0
    %v618 = vadd.f32 0.0, %v617
    %v619 = vpop.f32.mrb[0].mxu0
    %620 = vmatprep.mubr.f32.mxu0 0.0
    %621 = vmatmul.mubr.f32.gmra.mrb[0].mxu0 %v255
    %v622 = vpop.f32.mrb[0].mxu0
    %v623 = vadd.f32 0.0, %v622
    %v624 = vpop.f32.mrb[0].mxu0
    %625 = vmatprep.mubr.f32.mxu0 0.0
    %626 = vmatmul.mubr.f32.gmra.mrb[0].mxu0 %v258
    %v627 = vpop.f32.mrb[0].mxu0
    %v628 = vadd.f32 0.0, %v627
    %v629 = vpop.f32.mrb[0].mxu0
    %630 = vmatprep.mubr.f32.mxu0 0.0
    %631 = vmatmul.mubr.f32.gmra.mrb[0].mxu0 %v261
    %v632 = vpop.f32.mrb[0].mxu0
    %v633 = vadd.f32 0.0, %v632
    %v634 = vpop.f32.mrb[0].mxu0
    %635 = vmatprep.mubr.f32.mxu0 0.0
    %636 = vmatmul.mubr.f32.gmra.mrb[0].mxu0 %v264
    %v637 = vpop.f32.mrb[0].mxu0
    %v638 = vadd.f32 0.0, %v637
    %v639 = vpop.f32.mrb[0].mxu0
    %640 = vmatprep.mubr.f32.mxu0 0.0
    %641 = vmatmul.mubr.f32.gmra.mrb[0].mxu0 %v267
    %v642 = vpop.f32.mrb[0].mxu0
    %v643 = vadd.f32 0.0, %v642
    %v644 = vpop.f32.mrb[0].mxu0
    %645 = vmatprep.mubr.f32.mxu0 0.0
    %646 = vmatmul.mubr.f32.gmra.mrb[0].mxu0 %v270
    %v647 = vpop.f32.mrb[0].mxu0
    %v648 = vadd.f32 0.0, %v647
    %v649 = vpop.f32.mrb[0].mxu0
    %650 = vmatprep.mubr.f32.mxu0 0.0
    %651 = vmatmul.mubr.f32.gmra.mrb[0].mxu0 %v273
    %v652 = vpop.f32.mrb[0].mxu0
    %v653 = vadd.f32 0.0, %v652
    %v654 = vpop.f32.mrb[0].mxu0
    %655 = vmatprep.mubr.f32.mxu0 0.0
    %656 = vmatmul.mubr.f32.gmra.mrb[0].mxu0 %v276
    %v657 = vpop.f32.mrb[0].mxu0
    %v658 = vadd.f32 0.0, %v657
    %v659 = vpop.f32.mrb[0].mxu0
    %660 = vmatprep.mubr.f32.mxu0 0.0
    %661 = vmatmul.mubr.f32.gmra.mrb[0].mxu0 %v279
    %v662 = vpop.f32.mrb[0].mxu0
    %v663 = vadd.f32 0.0, %v662
    %v664 = vpop.f32.mrb[0].mxu0
    %665 = vdwg.mxu0
    %666 = vxpose.xlu0.b32.start [1/16] %v348, 128
    %667 = vxpose.xlu0.b32.cont [2/16] %v353, 128
    %668 = vxpose.xlu0.b32.cont [3/16] %v358, 128
    %669 = vxpose.xlu0.b32.cont [4/16] %v363, 128
    %670 = vxpose.xlu0.b32.cont [5/16] %v368, 128
    %671 = vxpose.xlu0.b32.cont [6/16] %v373, 128
    %672 = vxpose.xlu0.b32.cont [7/16] %v378, 128
    %673 = vxpose.xlu0.b32.cont [8/16] %v383, 128
    %674 = vxpose.xlu0.b32.cont [9/16] %v388, 128
    %675 = vxpose.xlu0.b32.cont [10/16] %v393, 128
    %676 = vxpose.xlu0.b32.cont [11/16] %v398, 128
    %677 = vxpose.xlu0.b32.cont [12/16] %v403, 128
    %678 = vxpose.xlu0.b32.cont [13/16] %v408, 128
    %679 = vxpose.xlu0.b32.cont [14/16] %v413, 128
    %680 = vxpose.xlu0.b32.cont [15/16] %v418, 128
    %681 = vxpose.xlu0.b32.end [16/16] %v423, 128
    %v682 = vpop.trf.xlu0
    %v683 = vpop.trf.xlu0
    %v684 = vpop.trf.xlu0
    %v685 = vpop.trf.xlu0
    %v686 = vpop.trf.xlu0
    %v687 = vpop.trf.xlu0
    %v688 = vpop.trf.xlu0
    %v689 = vpop.trf.xlu0
    %v690 = vpop.trf.xlu0
    %v691 = vpop.trf.xlu0
    %v692 = vpop.trf.xlu0
    %v693 = vpop.trf.xlu0
    %v694 = vpop.trf.xlu0
    %v695 = vpop.trf.xlu0
    %v696 = vpop.trf.xlu0
    %v697 = vpop.trf.xlu0
    %698 = vxpose.xlu0.b32.start [1/16] %v428, 128
    %699 = vxpose.xlu0.b32.cont [2/16] %v433, 128
    %700 = vxpose.xlu0.b32.cont [3/16] %v438, 128
    %701 = vxpose.xlu0.b32.cont [4/16] %v443, 128
    %702 = vxpose.xlu0.b32.cont [5/16] %v448, 128
    %703 = vxpose.xlu0.b32.cont [6/16] %v453, 128
    %704 = vxpose.xlu0.b32.cont [7/16] %v458, 128
    %705 = vxpose.xlu0.b32.cont [8/16] %v463, 128
    %706 = vxpose.xlu0.b32.cont [9/16] %v468, 128
    %707 = vxpose.xlu0.b32.cont [10/16] %v473, 128
    %708 = vxpose.xlu0.b32.cont [11/16] %v478, 128
    %709 = vxpose.xlu0.b32.cont [12/16] %v483, 128
    %710 = vxpose.xlu0.b32.cont [13/16] %v488, 128
    %711 = vxpose.xlu0.b32.cont [14/16] %v493, 128
    %712 = vxpose.xlu0.b32.cont [15/16] %v498, 128
    %713 = vxpose.xlu0.b32.end [16/16] %v503, 128
    %v714 = vpop.trf.xlu0
    %v715 = vpop.trf.xlu0
    %v716 = vpop.trf.xlu0
    %v717 = vpop.trf.xlu0
    %v718 = vpop.trf.xlu0
    %v719 = vpop.trf.xlu0
    %v720 = vpop.trf.xlu0
    %v721 = vpop.trf.xlu0
    %v722 = vpop.trf.xlu0
    %v723 = vpop.trf.xlu0
    %v724 = vpop.trf.xlu0
    %v725 = vpop.trf.xlu0
    %v726 = vpop.trf.xlu0
    %v727 = vpop.trf.xlu0
    %v728 = vpop.trf.xlu0
    %v729 = vpop.trf.xlu0
    %730 = vxpose.xlu0.b32.start [1/16] %v508, 128
    %731 = vxpose.xlu0.b32.cont [2/16] %v513, 128
    %732 = vxpose.xlu0.b32.cont [3/16] %v518, 128
    %733 = vxpose.xlu0.b32.cont [4/16] %v523, 128
    %734 = vxpose.xlu0.b32.cont [5/16] %v528, 128
    %735 = vxpose.xlu0.b32.cont [6/16] %v533, 128
    %736 = vxpose.xlu0.b32.cont [7/16] %v538, 128
    %737 = vxpose.xlu0.b32.cont [8/16] %v543, 128
    %738 = vxpose.xlu0.b32.cont [9/16] %v548, 128
    %739 = vxpose.xlu0.b32.cont [10/16] %v553, 128
    %740 = vxpose.xlu0.b32.cont [11/16] %v558, 128
    %741 = vxpose.xlu0.b32.cont [12/16] %v563, 128
    %742 = vxpose.xlu0.b32.cont [13/16] %v568, 128
    %743 = vxpose.xlu0.b32.cont [14/16] %v573, 128
    %744 = vxpose.xlu0.b32.cont [15/16] %v578, 128
    %745 = vxpose.xlu0.b32.end [16/16] %v583, 128
    %v746 = vpop.trf.xlu0
    %v747 = vpop.trf.xlu0
    %v748 = vpop.trf.xlu0
    %v749 = vpop.trf.xlu0
    %v750 = vpop.trf.xlu0
    %v751 = vpop.trf.xlu0
    %v752 = vpop.trf.xlu0
    %v753 = vpop.trf.xlu0
    %v754 = vpop.trf.xlu0
    %v755 = vpop.trf.xlu0
    %v756 = vpop.trf.xlu0
    %v757 = vpop.trf.xlu0
    %v758 = vpop.trf.xlu0
    %v759 = vpop.trf.xlu0
    %v760 = vpop.trf.xlu0
    %v761 = vpop.trf.xlu0
    %762 = vxpose.xlu0.b32.start [1/16] %v588, 128
    %763 = vxpose.xlu0.b32.cont [2/16] %v593, 128
    %764 = vxpose.xlu0.b32.cont [3/16] %v598, 128
    %765 = vxpose.xlu0.b32.cont [4/16] %v603, 128
    %766 = vxpose.xlu0.b32.cont [5/16] %v608, 128
    %767 = vxpose.xlu0.b32.cont [6/16] %v613, 128
    %768 = vxpose.xlu0.b32.cont [7/16] %v618, 128
    %769 = vxpose.xlu0.b32.cont [8/16] %v623, 128
    %770 = vxpose.xlu0.b32.cont [9/16] %v628, 128
    %771 = vxpose.xlu0.b32.cont [10/16] %v633, 128
    %772 = vxpose.xlu0.b32.cont [11/16] %v638, 128
    %773 = vxpose.xlu0.b32.cont [12/16] %v643, 128
    %774 = vxpose.xlu0.b32.cont [13/16] %v648, 128
    %775 = vxpose.xlu0.b32.cont [14/16] %v653, 128
    %776 = vxpose.xlu0.b32.cont [15/16] %v658, 128
    %777 = vxpose.xlu0.b32.end [16/16] %v663, 128
    %v778 = vpop.trf.xlu0
    %v779 = vpop.trf.xlu0
    %v780 = vpop.trf.xlu0
    %v781 = vpop.trf.xlu0
    %v782 = vpop.trf.xlu0
    %v783 = vpop.trf.xlu0
    %v784 = vpop.trf.xlu0
    %v785 = vpop.trf.xlu0
    %v786 = vpop.trf.xlu0
    %v787 = vpop.trf.xlu0
    %v788 = vpop.trf.xlu0
    %v789 = vpop.trf.xlu0
    %v790 = vpop.trf.xlu0
    %v791 = vpop.trf.xlu0
    %v792 = vpop.trf.xlu0
    %v793 = vpop.trf.xlu0
    %v798 = vcombine.low %v682, %v714
    %v799 = vcombine.low %v746, %v778
    %802 = vst [vmem:[#allocation2] sm:$0xff] %v798
    %803 = vst [vmem:[#allocation2 + $0x8] sm:$0xff] %v799
    // Predicated region
    $region10: #{tpu_custom_call.1} parent=1 // pred_check
      _
    $region11: #{tpu_custom_call.1} parent=1 // pred_check_branch
      %805 = sbr.rel (0) target = $region13
    $region12: #{tpu_custom_call.1} parent=1 // pred_region
      %s807 = ssub.s32 256, 256
      %808 = vsyncadd [#allocation3], %s807
      %s810 = sshll.u32 [#allocation2], 4
      %s811 = int_to_ptr.vmem [resolvable:$true] %s810
      %813 = dma.vmem_to_hbm [thread:$0]  %s811, 256, %s2, [#allocation3]
    $region13: #{tpu_custom_call.1} parent=1 // pred_fallthru
      _
    // Predicated region
    $region14: #{tpu_custom_call.1} parent=1 // pred_check
      _
    $region15: #{tpu_custom_call.1} parent=1 // pred_check_branch
      %815 = sbr.rel (0) target = $region17
    $region16: #{tpu_custom_call.1} parent=1 // pred_region
      %816 = dma.done [#allocation3], 256
    $region17: #{tpu_custom_call.1} parent=1 // pred_fallthru
      _
    %817 = vsyncpa [#allocation3], 1

</llo_original>
